<compile_context>
chip_gen: v5e
topology: v5e:2x2
jax: 0.10.0
libtpu: 0.0.40
codegen_flags: <defaults>
</compile_context>

<pallas_src>
import functools

import jax
import jax.numpy as jnp
from jax.experimental import pallas as pl
from jax.experimental.pallas import tpu as pltpu


def _h_sigmoid_kernel(x_ref, o_ref):
    # h_sigmoid(x) = ReLU6(x + 3) / 6 == clamp(x + 3, 0, 6) / 6
    x = x_ref[...].astype(jnp.float32)
    o_ref[...] = (jnp.clip(x + 3.0, 0.0, 6.0) / 6.0).astype(o_ref.dtype)


def _round_up(a, b):
    return -(-a // b) * b


@functools.lru_cache(maxsize=1)
def _hw_params():
    """(target_block_bytes, vmem_limit_bytes, num_tensorcores) for this part."""
    vmem = None
    try:
        vmem = int(pltpu.get_tpu_info().vmem_capacity_bytes)
    except Exception:  # interpret mode / older jax: fall back to safe defaults
        pass
    if vmem is not None and vmem <= 80 * 1024 * 1024:
        # v7x-class: 64 MiB VMEM per TensorCore, 2 TCs per chip.
        # 8 MiB blocks -> ~32 MiB pipelined (in+out double buffered) < 40 MiB.
        return 8 * 1024 * 1024, 40 * 1024 * 1024, 2
    if vmem is not None:
        # v5e / v6e: 128 MiB physical VMEM, single TensorCore per chip.
        return 8 * 1024 * 1024, 48 * 1024 * 1024, 1
    # Unknown hardware: conservative sizes that fit every generation.
    return 4 * 1024 * 1024, 32 * 1024 * 1024, 1


def _pick_lane_width(n):
    """Lane-dense width C (multiple of 128); prefer an exact divisor of n."""
    if n % 2048 == 0:
        return 2048, False
    # Largest multiple of 128 (<= 8192) that divides n exactly -> no pad pass.
    c = (min(8192, n) // 128) * 128
    while c >= 128:
        if n % c == 0:
            return c, False
        c -= 128
    # No suitable divisor: fall back to padding the flat tensor (rare).
    if n < 2048:
        return _round_up(n, 128), True
    return 2048, True


def _pick_row_tile(rows, sub, row_bytes, target_block_bytes, num_tc):
    """Row-tile size + grid length; near-equal blocks on 2-TC parts."""
    tr = max(sub, (target_block_bytes // row_bytes) // sub * sub)
    if tr >= rows:
        tr, grid_r = rows, 1  # single full-extent block (allowed: dim == full)
    else:
        grid_r = -(-rows // tr)
    if num_tc >= 2:
        # Keep both TensorCores busy and balanced for small grids.
        if grid_r == 1 and rows > 2 * sub:
            grid_r = 2
        if 2 <= grid_r <= 4:
            tr = min(rows, _round_up(-(-rows // grid_r), sub))
            grid_r = -(-rows // tr)
    return tr, grid_r


def h_sigmoid(x, donate=False):
    """Elementwise hard-sigmoid: relu6(x + 3) / 6 (matches the PyTorch module)."""
    orig_shape = x.shape
    dtype = x.dtype
    n = int(x.size)
    if n == 0:
        return x

    if not jnp.issubdtype(dtype, jnp.floating):
        # Integer input: torch's `relu6(x + 3) / 6` true-divides into float.
        return jnp.clip(x.astype(jnp.float32) + 3.0, 0.0, 6.0) / 6.0

    itemsize = jnp.dtype(dtype).itemsize

    # Tiny tensors: the fused XLA expression is strictly cheaper than a
    # Pallas custom-call launch and doesn't block producer fusion.
    if n * itemsize < 256 * 1024:
        return (jnp.clip(x.astype(jnp.float32) + 3.0, 0.0, 6.0) / 6.0).astype(dtype)

    target_block_bytes, vmem_limit_bytes, num_tc = _hw_params()

    # dtype-aware sublane multiple: 8 for 4-byte, 16 for 2-byte, 32 for 1-byte.
    sub = max(8, 32 // max(itemsize, 1))

    C, needs_pad = _pick_lane_width(n)
    rows = -(-n // C)
    tr, grid_r = _pick_row_tile(rows, sub, C * itemsize, target_block_bytes, num_tc)

    total = rows * C
    xf = x.reshape(-1)
    if needs_pad and total != n:  # only pay the pad pass when unavoidable
        xf = jnp.pad(xf, (0, total - n))
    x2 = xf.reshape(rows, C)

    out2 = pl.pallas_call(
        _h_sigmoid_kernel,
        out_shape=jax.ShapeDtypeStruct((rows, C), dtype),
        grid=(grid_r,),
        in_specs=[pl.BlockSpec((tr, C), lambda i: (i, 0))],
        out_specs=pl.BlockSpec((tr, C), lambda i: (i, 0)),
        compiler_params=pltpu.CompilerParams(
            dimension_semantics=("parallel",),
            vmem_limit_bytes=vmem_limit_bytes,
        ),
        cost_estimate=pl.CostEstimate(
            flops=3 * n,
            transcendentals=0,
            bytes_accessed=2 * n * itemsize,
        ),
        input_output_aliases=({0: 0} if donate else {}),
    )(x2)

    if total != n:
        return out2.reshape(-1)[:n].reshape(orig_shape)
    return out2.reshape(orig_shape)


if __name__ == "__main__":
    def ref(v):
        return jnp.clip(v.astype(jnp.float32) + 3.0, 0.0, 6.0) / 6.0

    ks = jax.random.split(jax.random.PRNGKey(0), 5)

    # 1) Module-typical small NCHW input (tiny -> fused jnp fast path).
    x0 = jax.random.normal(ks[0], (2, 4, 16, 16), jnp.float32) * 4.0
    y0 = jax.block_until_ready(h_sigmoid(x0))
    assert y0.shape == x0.shape and y0.dtype == x0.dtype
    assert jnp.max(jnp.abs(y0 - ref(x0))) < 1e-6

    # 2) Pallas path, n divisible by 2048 (multi-row slab).
    x1 = jax.random.normal(ks[1], (8, 16, 32, 32), jnp.float32) * 4.0
    y1 = jax.block_until_ready(h_sigmoid(x1))
    assert y1.shape == x1.shape and y1.dtype == x1.dtype
    assert jnp.max(jnp.abs(y1 - ref(x1))) < 1e-6

    # 3) Pallas path, divisor-search lane width (75264 = 128*588, not %2048 == 0).
    x2 = jax.random.normal(ks[2], (1, 24, 56, 56), jnp.float32) * 4.0
    y2 = jax.block_until_ready(h_sigmoid(x2))
    assert jnp.max(jnp.abs(y2 - ref(x2))) < 1e-6

    # 4) Pallas path, pad fallback (66049 = 257*257 has no multiple-of-128 divisor).
    x3 = jax.random.normal(ks[3], (1, 1, 257, 257), jnp.float32) * 4.0
    y3 = jax.block_until_ready(h_sigmoid(x3))
    assert jnp.max(jnp.abs(y3 - ref(x3))) < 1e-6

    # 5) Pallas path, bf16 (16-sublane packing, f32 internal math).
    x4 = (jax.random.normal(ks[4], (4, 32, 32, 32), jnp.float32) * 4.0).astype(jnp.bfloat16)
    y4 = jax.block_until_ready(h_sigmoid(x4))
    assert y4.dtype == jnp.bfloat16
    assert jnp.max(jnp.abs(y4.astype(jnp.float32) - ref(x4))) < 1e-2

    print("KERNEL_OK")
</pallas_src>

<mosaic_0001>
module attributes {stable_mosaic.version = 11 : i64} {
  func.func @_h_sigmoid_kernel(%arg0: i32, %arg1: memref<64x2048xf32, #tpu.memory_space<vmem>>, %arg2: memref<64x2048xf32, #tpu.memory_space<vmem>>) attributes {dimension_semantics = [#tpu.dimension_semantics<parallel>], iteration_bounds = array<i64: 1>, scalar_prefetch = 0 : i64, scratch_operands = 0 : i64, tpu.core_type = #tpu.core_type<tc>, window_params = [{transform_indices = @transform_0, window_bounds = array<i64: 64, 2048>}, {transform_indices = @transform_1, window_bounds = array<i64: 64, 2048>}]} {
    %c0 = arith.constant 0 : index
    %c0_0 = arith.constant 0 : index
    %0 = vector.load %arg1[%c0, %c0_0] : memref<64x2048xf32, #tpu.memory_space<vmem>>, vector<64x2048xf32>
    %cst = arith.constant 3.000000e+00 : f32
    %1 = vector.broadcast %cst : f32 to vector<64x2048xf32>
    %2 = arith.addf %0, %1 : vector<64x2048xf32>
    %cst_1 = arith.constant 0.000000e+00 : f32
    %cst_2 = arith.constant 6.000000e+00 : f32
    %3 = vector.broadcast %cst_1 : f32 to vector<64x2048xf32>
    %4 = arith.maximumf %3, %2 : vector<64x2048xf32>
    %5 = vector.broadcast %cst_2 : f32 to vector<64x2048xf32>
    %6 = arith.minimumf %5, %4 : vector<64x2048xf32>
    %cst_3 = arith.constant 6.000000e+00 : f32
    %7 = vector.broadcast %cst_3 : f32 to vector<64x2048xf32>
    %8 = arith.divf %6, %7 : vector<64x2048xf32>
    %c0_4 = arith.constant 0 : index
    %c0_5 = arith.constant 0 : index
    %9 = vector.load %arg2[%c0_4, %c0_5] : memref<64x2048xf32, #tpu.memory_space<vmem>>, vector<64x2048xf32>
    tpu.vector_store %arg2[%c0_4, %c0_5], %8 {strides = array<i32>} : memref<64x2048xf32, #tpu.memory_space<vmem>>, vector<64x2048xf32>,
    return
  }
  func.func @transform_0(%arg0: i32) -> (i32, i32) {
    %c0_i32 = arith.constant 0 : i32
    %c0_i32_0 = arith.constant 0 : i32
    return %arg0, %c0_i32 : i32, i32
  }
  func.func @transform_1(%arg0: i32) -> (i32, i32) {
    %c0_i32 = arith.constant 0 : i32
    %c0_i32_0 = arith.constant 0 : i32
    return %arg0, %c0_i32 : i32, i32
  }
}

</mosaic_0001>

<llo_original>
// kernel: tpu_custom_call.1
$region0: #{tpu_custom_call.1}
  #allocation0 [shape = 'u32[]', space=smem, size = 0x4, offset = 0x4, fixed_abs, tag = 'smem constant byte address 0x4 - core index']
  #allocation1 [shape = 'u32[72,128]{1,0:T(1,128)}', space=vmem, size = 0x9000, scoped, tag = 'internal scratch']
  %s0 = inlined_call_operand.hbm [shape: f32[64,2048], index: 0, kind: input, shape index: {}]
  %s1 = inlined_call_operand.hbm [shape: f32[64,2048], index: 1, kind: output, shape index: {}]
  %s2 = sld [smem:[#allocation0]]
  $region18: #{tpu_custom_call.1} parent=0
    _
  %s4 = ssub.s32 1, %s2
  %s5 = scalar_select 0, %s4, %s2
  $region1: #{tpu_custom_call.1} parent=0
    #allocation2 [shape = 'u8[524288]{0}', space=vmem, size = 0x80000, scoped, tag = 'input window, operand 0, single buffered']
    #allocation3 [shape = 's32[1]{0}', space=sflag, size = 0x4, scoped, tag = 'scoped memory for tpu_custom_call.1']
    #allocation4 [shape = 's32[1]{0}', space=sflag, size = 0x4, scoped, tag = 'scoped memory for tpu_custom_call.1']
    #allocation5 [shape = 'u8[524288]{0}', space=vmem, size = 0x80000, scoped, tag = 'output window, operand 0, single buffered']
    %6 = vsyncpa [#allocation3], 0
    %7 = vsyncpa [#allocation4], 0
    // Predicated region
    $region2: #{tpu_custom_call.1} parent=1 // pred_check
      _
    $region3: #{tpu_custom_call.1} parent=1 // pred_check_branch
      %9 = sbr.rel (0) target = $region5
    $region4: #{tpu_custom_call.1} parent=1 // pred_region
      %11 = vsyncadd [#allocation3], 0
      %s12 = sshll.u32 %s0, 4
      %s13 = int_to_ptr.hbm [resolvable:$true] %s12
      %s14 = sshll.u32 [#allocation2], 4
      %s15 = int_to_ptr.vmem [resolvable:$true] %s14
      %20 = dma.hbm_to_vmem [thread:$0]  %s13, 16384, %s15, [#allocation3], 2048, 2048, 128
    $region5: #{tpu_custom_call.1} parent=1 // pred_fallthru
      _
    // Predicated region
    $region6: #{tpu_custom_call.1} parent=1 // pred_check
      _
    $region7: #{tpu_custom_call.1} parent=1 // pred_check_branch
      %22 = sbr.rel (0) target = $region9
    $region8: #{tpu_custom_call.1} parent=1 // pred_region
      %24 = dma.done [#allocation3], 16384
    $region9: #{tpu_custom_call.1} parent=1 // pred_fallthru
      _
    %v25 = vld [vmem:[#allocation2] sm:$0xff]
    %v26 = vld [vmem:[#allocation2 + $0x8] sm:$0xff]
    %v27 = vld [vmem:[#allocation2 + $0x10] sm:$0xff]
    %v28 = vld [vmem:[#allocation2 + $0x18] sm:$0xff]
    %v29 = vld [vmem:[#allocation2 + $0x20] sm:$0xff]
    %v30 = vld [vmem:[#allocation2 + $0x28] sm:$0xff]
    %v31 = vld [vmem:[#allocation2 + $0x30] sm:$0xff]
    %v32 = vld [vmem:[#allocation2 + $0x38] sm:$0xff]
    %v33 = vld [vmem:[#allocation2 + $0x40] sm:$0xff]
    %v34 = vld [vmem:[#allocation2 + $0x48] sm:$0xff]
    %v35 = vld [vmem:[#allocation2 + $0x50] sm:$0xff]
    %v36 = vld [vmem:[#allocation2 + $0x58] sm:$0xff]
    %v37 = vld [vmem:[#allocation2 + $0x60] sm:$0xff]
    %v38 = vld [vmem:[#allocation2 + $0x68] sm:$0xff]
    %v39 = vld [vmem:[#allocation2 + $0x70] sm:$0xff]
    %v40 = vld [vmem:[#allocation2 + $0x78] sm:$0xff]
    %v41 = vld [vmem:[#allocation2 + $0x80] sm:$0xff]
    %v42 = vld [vmem:[#allocation2 + $0x88] sm:$0xff]
    %v43 = vld [vmem:[#allocation2 + $0x90] sm:$0xff]
    %v44 = vld [vmem:[#allocation2 + $0x98] sm:$0xff]
    %v45 = vld [vmem:[#allocation2 + $0xa0] sm:$0xff]
    %v46 = vld [vmem:[#allocation2 + $0xa8] sm:$0xff]
    %v47 = vld [vmem:[#allocation2 + $0xb0] sm:$0xff]
    %v48 = vld [vmem:[#allocation2 + $0xb8] sm:$0xff]
    %v49 = vld [vmem:[#allocation2 + $0xc0] sm:$0xff]
    %v50 = vld [vmem:[#allocation2 + $0xc8] sm:$0xff]
    %v51 = vld [vmem:[#allocation2 + $0xd0] sm:$0xff]
    %v52 = vld [vmem:[#allocation2 + $0xd8] sm:$0xff]
    %v53 = vld [vmem:[#allocation2 + $0xe0] sm:$0xff]
    %v54 = vld [vmem:[#allocation2 + $0xe8] sm:$0xff]
    %v55 = vld [vmem:[#allocation2 + $0xf0] sm:$0xff]
    %v56 = vld [vmem:[#allocation2 + $0xf8] sm:$0xff]
    %v57 = vld [vmem:[#allocation2 + $0x100] sm:$0xff]
    %v58 = vld [vmem:[#allocation2 + $0x108] sm:$0xff]
    %v59 = vld [vmem:[#allocation2 + $0x110] sm:$0xff]
    %v60 = vld [vmem:[#allocation2 + $0x118] sm:$0xff]
    %v61 = vld [vmem:[#allocation2 + $0x120] sm:$0xff]
    %v62 = vld [vmem:[#allocation2 + $0x128] sm:$0xff]
    %v63 = vld [vmem:[#allocation2 + $0x130] sm:$0xff]
    %v64 = vld [vmem:[#allocation2 + $0x138] sm:$0xff]
    %v65 = vld [vmem:[#allocation2 + $0x140] sm:$0xff]
    %v66 = vld [vmem:[#allocation2 + $0x148] sm:$0xff]
    %v67 = vld [vmem:[#allocation2 + $0x150] sm:$0xff]
    %v68 = vld [vmem:[#allocation2 + $0x158] sm:$0xff]
    %v69 = vld [vmem:[#allocation2 + $0x160] sm:$0xff]
    %v70 = vld [vmem:[#allocation2 + $0x168] sm:$0xff]
    %v71 = vld [vmem:[#allocation2 + $0x170] sm:$0xff]
    %v72 = vld [vmem:[#allocation2 + $0x178] sm:$0xff]
    %v73 = vld [vmem:[#allocation2 + $0x180] sm:$0xff]
    %v74 = vld [vmem:[#allocation2 + $0x188] sm:$0xff]
    %v75 = vld [vmem:[#allocation2 + $0x190] sm:$0xff]
    %v76 = vld [vmem:[#allocation2 + $0x198] sm:$0xff]
    %v77 = vld [vmem:[#allocation2 + $0x1a0] sm:$0xff]
    %v78 = vld [vmem:[#allocation2 + $0x1a8] sm:$0xff]
    %v79 = vld [vmem:[#allocation2 + $0x1b0] sm:$0xff]
    %v80 = vld [vmem:[#allocation2 + $0x1b8] sm:$0xff]
    %v81 = vld [vmem:[#allocation2 + $0x1c0] sm:$0xff]
    %v82 = vld [vmem:[#allocation2 + $0x1c8] sm:$0xff]
    %v83 = vld [vmem:[#allocation2 + $0x1d0] sm:$0xff]
    %v84 = vld [vmem:[#allocation2 + $0x1d8] sm:$0xff]
    %v85 = vld [vmem:[#allocation2 + $0x1e0] sm:$0xff]
    %v86 = vld [vmem:[#allocation2 + $0x1e8] sm:$0xff]
    %v87 = vld [vmem:[#allocation2 + $0x1f0] sm:$0xff]
    %v88 = vld [vmem:[#allocation2 + $0x1f8] sm:$0xff]
    %v89 = vld [vmem:[#allocation2 + $0x200] sm:$0xff]
    %v90 = vld [vmem:[#allocation2 + $0x208] sm:$0xff]
    %v91 = vld [vmem:[#allocation2 + $0x210] sm:$0xff]
    %v92 = vld [vmem:[#allocation2 + $0x218] sm:$0xff]
    %v93 = vld [vmem:[#allocation2 + $0x220] sm:$0xff]
    %v94 = vld [vmem:[#allocation2 + $0x228] sm:$0xff]
    %v95 = vld [vmem:[#allocation2 + $0x230] sm:$0xff]
    %v96 = vld [vmem:[#allocation2 + $0x238] sm:$0xff]
    %v97 = vld [vmem:[#allocation2 + $0x240] sm:$0xff]
    %v98 = vld [vmem:[#allocation2 + $0x248] sm:$0xff]
    %v99 = vld [vmem:[#allocation2 + $0x250] sm:$0xff]
    %v100 = vld [vmem:[#allocation2 + $0x258] sm:$0xff]
    %v101 = vld [vmem:[#allocation2 + $0x260] sm:$0xff]
    %v102 = vld [vmem:[#allocation2 + $0x268] sm:$0xff]
    %v103 = vld [vmem:[#allocation2 + $0x270] sm:$0xff]
    %v104 = vld [vmem:[#allocation2 + $0x278] sm:$0xff]
    %v105 = vld [vmem:[#allocation2 + $0x280] sm:$0xff]
    %v106 = vld [vmem:[#allocation2 + $0x288] sm:$0xff]
    %v107 = vld [vmem:[#allocation2 + $0x290] sm:$0xff]
    %v108 = vld [vmem:[#allocation2 + $0x298] sm:$0xff]
    %v109 = vld [vmem:[#allocation2 + $0x2a0] sm:$0xff]
    %v110 = vld [vmem:[#allocation2 + $0x2a8] sm:$0xff]
    %v111 = vld [vmem:[#allocation2 + $0x2b0] sm:$0xff]
    %v112 = vld [vmem:[#allocation2 + $0x2b8] sm:$0xff]
    %v113 = vld [vmem:[#allocation2 + $0x2c0] sm:$0xff]
    %v114 = vld [vmem:[#allocation2 + $0x2c8] sm:$0xff]
    %v115 = vld [vmem:[#allocation2 + $0x2d0] sm:$0xff]
    %v116 = vld [vmem:[#allocation2 + $0x2d8] sm:$0xff]
    %v117 = vld [vmem:[#allocation2 + $0x2e0] sm:$0xff]
    %v118 = vld [vmem:[#allocation2 + $0x2e8] sm:$0xff]
    %v119 = vld [vmem:[#allocation2 + $0x2f0] sm:$0xff]
    %v120 = vld [vmem:[#allocation2 + $0x2f8] sm:$0xff]
    %v121 = vld [vmem:[#allocation2 + $0x300] sm:$0xff]
    %v122 = vld [vmem:[#allocation2 + $0x308] sm:$0xff]
    %v123 = vld [vmem:[#allocation2 + $0x310] sm:$0xff]
    %v124 = vld [vmem:[#allocation2 + $0x318] sm:$0xff]
    %v125 = vld [vmem:[#allocation2 + $0x320] sm:$0xff]
    %v126 = vld [vmem:[#allocation2 + $0x328] sm:$0xff]
    %v127 = vld [vmem:[#allocation2 + $0x330] sm:$0xff]
    %v128 = vld [vmem:[#allocation2 + $0x338] sm:$0xff]
    %v129 = vld [vmem:[#allocation2 + $0x340] sm:$0xff]
    %v130 = vld [vmem:[#allocation2 + $0x348] sm:$0xff]
    %v131 = vld [vmem:[#allocation2 + $0x350] sm:$0xff]
    %v132 = vld [vmem:[#allocation2 + $0x358] sm:$0xff]
    %v133 = vld [vmem:[#allocation2 + $0x360] sm:$0xff]
    %v134 = vld [vmem:[#allocation2 + $0x368] sm:$0xff]
    %v135 = vld [vmem:[#allocation2 + $0x370] sm:$0xff]
    %v136 = vld [vmem:[#allocation2 + $0x378] sm:$0xff]
    %v137 = vld [vmem:[#allocation2 + $0x380] sm:$0xff]
    %v138 = vld [vmem:[#allocation2 + $0x388] sm:$0xff]
    %v139 = vld [vmem:[#allocation2 + $0x390] sm:$0xff]
    %v140 = vld [vmem:[#allocation2 + $0x398] sm:$0xff]
    %v141 = vld [vmem:[#allocation2 + $0x3a0] sm:$0xff]
    %v142 = vld [vmem:[#allocation2 + $0x3a8] sm:$0xff]
    %v143 = vld [vmem:[#allocation2 + $0x3b0] sm:$0xff]
    %v144 = vld [vmem:[#allocation2 + $0x3b8] sm:$0xff]
    %v145 = vld [vmem:[#allocation2 + $0x3c0] sm:$0xff]
    %v146 = vld [vmem:[#allocation2 + $0x3c8] sm:$0xff]
    %v147 = vld [vmem:[#allocation2 + $0x3d0] sm:$0xff]
    %v148 = vld [vmem:[#allocation2 + $0x3d8] sm:$0xff]
    %v149 = vld [vmem:[#allocation2 + $0x3e0] sm:$0xff]
    %v150 = vld [vmem:[#allocation2 + $0x3e8] sm:$0xff]
    %v151 = vld [vmem:[#allocation2 + $0x3f0] sm:$0xff]
    %v152 = vld [vmem:[#allocation2 + $0x3f8] sm:$0xff]
    %v153 = vadd.f32 %v25, 3.0
    %v154 = vadd.f32 %v26, 3.0
    %v155 = vadd.f32 %v27, 3.0
    %v156 = vadd.f32 %v28, 3.0
    %v157 = vadd.f32 %v29, 3.0
    %v158 = vadd.f32 %v30, 3.0
    %v159 = vadd.f32 %v31, 3.0
    %v160 = vadd.f32 %v32, 3.0
    %v161 = vadd.f32 %v33, 3.0
    %v162 = vadd.f32 %v34, 3.0
    %v163 = vadd.f32 %v35, 3.0
    %v164 = vadd.f32 %v36, 3.0
    %v165 = vadd.f32 %v37, 3.0
    %v166 = vadd.f32 %v38, 3.0
    %v167 = vadd.f32 %v39, 3.0
    %v168 = vadd.f32 %v40, 3.0
    %v169 = vadd.f32 %v41, 3.0
    %v170 = vadd.f32 %v42, 3.0
    %v171 = vadd.f32 %v43, 3.0
    %v172 = vadd.f32 %v44, 3.0
    %v173 = vadd.f32 %v45, 3.0
    %v174 = vadd.f32 %v46, 3.0
    %v175 = vadd.f32 %v47, 3.0
    %v176 = vadd.f32 %v48, 3.0
    %v177 = vadd.f32 %v49, 3.0
    %v178 = vadd.f32 %v50, 3.0
    %v179 = vadd.f32 %v51, 3.0
    %v180 = vadd.f32 %v52, 3.0
    %v181 = vadd.f32 %v53, 3.0
    %v182 = vadd.f32 %v54, 3.0
    %v183 = vadd.f32 %v55, 3.0
    %v184 = vadd.f32 %v56, 3.0
    %v185 = vadd.f32 %v57, 3.0
    %v186 = vadd.f32 %v58, 3.0
    %v187 = vadd.f32 %v59, 3.0
    %v188 = vadd.f32 %v60, 3.0
    %v189 = vadd.f32 %v61, 3.0
    %v190 = vadd.f32 %v62, 3.0
    %v191 = vadd.f32 %v63, 3.0
    %v192 = vadd.f32 %v64, 3.0
    %v193 = vadd.f32 %v65, 3.0
    %v194 = vadd.f32 %v66, 3.0
    %v195 = vadd.f32 %v67, 3.0
    %v196 = vadd.f32 %v68, 3.0
    %v197 = vadd.f32 %v69, 3.0
    %v198 = vadd.f32 %v70, 3.0
    %v199 = vadd.f32 %v71, 3.0
    %v200 = vadd.f32 %v72, 3.0
    %v201 = vadd.f32 %v73, 3.0
    %v202 = vadd.f32 %v74, 3.0
    %v203 = vadd.f32 %v75, 3.0
    %v204 = vadd.f32 %v76, 3.0
    %v205 = vadd.f32 %v77, 3.0
    %v206 = vadd.f32 %v78, 3.0
    %v207 = vadd.f32 %v79, 3.0
    %v208 = vadd.f32 %v80, 3.0
    %v209 = vadd.f32 %v81, 3.0
    %v210 = vadd.f32 %v82, 3.0
    %v211 = vadd.f32 %v83, 3.0
    %v212 = vadd.f32 %v84, 3.0
    %v213 = vadd.f32 %v85, 3.0
    %v214 = vadd.f32 %v86, 3.0
    %v215 = vadd.f32 %v87, 3.0
    %v216 = vadd.f32 %v88, 3.0
    %v217 = vadd.f32 %v89, 3.0
    %v218 = vadd.f32 %v90, 3.0
    %v219 = vadd.f32 %v91, 3.0
    %v220 = vadd.f32 %v92, 3.0
    %v221 = vadd.f32 %v93, 3.0
    %v222 = vadd.f32 %v94, 3.0
    %v223 = vadd.f32 %v95, 3.0
    %v224 = vadd.f32 %v96, 3.0
    %v225 = vadd.f32 %v97, 3.0
    %v226 = vadd.f32 %v98, 3.0
    %v227 = vadd.f32 %v99, 3.0
    %v228 = vadd.f32 %v100, 3.0
    %v229 = vadd.f32 %v101, 3.0
    %v230 = vadd.f32 %v102, 3.0
    %v231 = vadd.f32 %v103, 3.0
    %v232 = vadd.f32 %v104, 3.0
    %v233 = vadd.f32 %v105, 3.0
    %v234 = vadd.f32 %v106, 3.0
    %v235 = vadd.f32 %v107, 3.0
    %v236 = vadd.f32 %v108, 3.0
    %v237 = vadd.f32 %v109, 3.0
    %v238 = vadd.f32 %v110, 3.0
    %v239 = vadd.f32 %v111, 3.0
    %v240 = vadd.f32 %v112, 3.0
    %v241 = vadd.f32 %v113, 3.0
    %v242 = vadd.f32 %v114, 3.0
    %v243 = vadd.f32 %v115, 3.0
    %v244 = vadd.f32 %v116, 3.0
    %v245 = vadd.f32 %v117, 3.0
    %v246 = vadd.f32 %v118, 3.0
    %v247 = vadd.f32 %v119, 3.0
    %v248 = vadd.f32 %v120, 3.0
    %v249 = vadd.f32 %v121, 3.0
    %v250 = vadd.f32 %v122, 3.0
    %v251 = vadd.f32 %v123, 3.0
    %v252 = vadd.f32 %v124, 3.0
    %v253 = vadd.f32 %v125, 3.0
    %v254 = vadd.f32 %v126, 3.0
    %v255 = vadd.f32 %v127, 3.0
    %v256 = vadd.f32 %v128, 3.0
    %v257 = vadd.f32 %v129, 3.0
    %v258 = vadd.f32 %v130, 3.0
    %v259 = vadd.f32 %v131, 3.0
    %v260 = vadd.f32 %v132, 3.0
    %v261 = vadd.f32 %v133, 3.0
    %v262 = vadd.f32 %v134, 3.0
    %v263 = vadd.f32 %v135, 3.0
    %v264 = vadd.f32 %v136, 3.0
    %v265 = vadd.f32 %v137, 3.0
    %v266 = vadd.f32 %v138, 3.0
    %v267 = vadd.f32 %v139, 3.0
    %v268 = vadd.f32 %v140, 3.0
    %v269 = vadd.f32 %v141, 3.0
    %v270 = vadd.f32 %v142, 3.0
    %v271 = vadd.f32 %v143, 3.0
    %v272 = vadd.f32 %v144, 3.0
    %v273 = vadd.f32 %v145, 3.0
    %v274 = vadd.f32 %v146, 3.0
    %v275 = vadd.f32 %v147, 3.0
    %v276 = vadd.f32 %v148, 3.0
    %v277 = vadd.f32 %v149, 3.0
    %v278 = vadd.f32 %v150, 3.0
    %v279 = vadd.f32 %v151, 3.0
    %v280 = vadd.f32 %v152, 3.0
    %v281 = vmax.f32 %v153, 0.0
    %v282 = vmax.f32 %v154, 0.0
    %v283 = vmax.f32 %v155, 0.0
    %v284 = vmax.f32 %v156, 0.0
    %v285 = vmax.f32 %v157, 0.0
    %v286 = vmax.f32 %v158, 0.0
    %v287 = vmax.f32 %v159, 0.0
    %v288 = vmax.f32 %v160, 0.0
    %v289 = vmax.f32 %v161, 0.0
    %v290 = vmax.f32 %v162, 0.0
    %v291 = vmax.f32 %v163, 0.0
    %v292 = vmax.f32 %v164, 0.0
    %v293 = vmax.f32 %v165, 0.0
    %v294 = vmax.f32 %v166, 0.0
    %v295 = vmax.f32 %v167, 0.0
    %v296 = vmax.f32 %v168, 0.0
    %v297 = vmax.f32 %v169, 0.0
    %v298 = vmax.f32 %v170, 0.0
    %v299 = vmax.f32 %v171, 0.0
    %v300 = vmax.f32 %v172, 0.0
    %v301 = vmax.f32 %v173, 0.0
    %v302 = vmax.f32 %v174, 0.0
    %v303 = vmax.f32 %v175, 0.0
    %v304 = vmax.f32 %v176, 0.0
    %v305 = vmax.f32 %v177, 0.0
    %v306 = vmax.f32 %v178, 0.0
    %v307 = vmax.f32 %v179, 0.0
    %v308 = vmax.f32 %v180, 0.0
    %v309 = vmax.f32 %v181, 0.0
    %v310 = vmax.f32 %v182, 0.0
    %v311 = vmax.f32 %v183, 0.0
    %v312 = vmax.f32 %v184, 0.0
    %v313 = vmax.f32 %v185, 0.0
    %v314 = vmax.f32 %v186, 0.0
    %v315 = vmax.f32 %v187, 0.0
    %v316 = vmax.f32 %v188, 0.0
    %v317 = vmax.f32 %v189, 0.0
    %v318 = vmax.f32 %v190, 0.0
    %v319 = vmax.f32 %v191, 0.0
    %v320 = vmax.f32 %v192, 0.0
    %v321 = vmax.f32 %v193, 0.0
    %v322 = vmax.f32 %v194, 0.0
    %v323 = vmax.f32 %v195, 0.0
    %v324 = vmax.f32 %v196, 0.0
    %v325 = vmax.f32 %v197, 0.0
    %v326 = vmax.f32 %v198, 0.0
    %v327 = vmax.f32 %v199, 0.0
    %v328 = vmax.f32 %v200, 0.0
    %v329 = vmax.f32 %v201, 0.0
    %v330 = vmax.f32 %v202, 0.0
    %v331 = vmax.f32 %v203, 0.0
    %v332 = vmax.f32 %v204, 0.0
    %v333 = vmax.f32 %v205, 0.0
    %v334 = vmax.f32 %v206, 0.0
    %v335 = vmax.f32 %v207, 0.0
    %v336 = vmax.f32 %v208, 0.0
    %v337 = vmax.f32 %v209, 0.0
    %v338 = vmax.f32 %v210, 0.0
    %v339 = vmax.f32 %v211, 0.0
    %v340 = vmax.f32 %v212, 0.0
    %v341 = vmax.f32 %v213, 0.0
    %v342 = vmax.f32 %v214, 0.0
    %v343 = vmax.f32 %v215, 0.0
    %v344 = vmax.f32 %v216, 0.0
    %v345 = vmax.f32 %v217, 0.0
    %v346 = vmax.f32 %v218, 0.0
    %v347 = vmax.f32 %v219, 0.0
    %v348 = vmax.f32 %v220, 0.0
    %v349 = vmax.f32 %v221, 0.0
    %v350 = vmax.f32 %v222, 0.0
    %v351 = vmax.f32 %v223, 0.0
    %v352 = vmax.f32 %v224, 0.0
    %v353 = vmax.f32 %v225, 0.0
    %v354 = vmax.f32 %v226, 0.0
    %v355 = vmax.f32 %v227, 0.0
    %v356 = vmax.f32 %v228, 0.0
    %v357 = vmax.f32 %v229, 0.0
    %v358 = vmax.f32 %v230, 0.0
    %v359 = vmax.f32 %v231, 0.0
    %v360 = vmax.f32 %v232, 0.0
    %v361 = vmax.f32 %v233, 0.0
    %v362 = vmax.f32 %v234, 0.0
    %v363 = vmax.f32 %v235, 0.0
    %v364 = vmax.f32 %v236, 0.0
    %v365 = vmax.f32 %v237, 0.0
    %v366 = vmax.f32 %v238, 0.0
    %v367 = vmax.f32 %v239, 0.0
    %v368 = vmax.f32 %v240, 0.0
    %v369 = vmax.f32 %v241, 0.0
    %v370 = vmax.f32 %v242, 0.0
    %v371 = vmax.f32 %v243, 0.0
    %v372 = vmax.f32 %v244, 0.0
    %v373 = vmax.f32 %v245, 0.0
    %v374 = vmax.f32 %v246, 0.0
    %v375 = vmax.f32 %v247, 0.0
    %v376 = vmax.f32 %v248, 0.0
    %v377 = vmax.f32 %v249, 0.0
    %v378 = vmax.f32 %v250, 0.0
    %v379 = vmax.f32 %v251, 0.0
    %v380 = vmax.f32 %v252, 0.0
    %v381 = vmax.f32 %v253, 0.0
    %v382 = vmax.f32 %v254, 0.0
    %v383 = vmax.f32 %v255, 0.0
    %v384 = vmax.f32 %v256, 0.0
    %v385 = vmax.f32 %v257, 0.0
    %v386 = vmax.f32 %v258, 0.0
    %v387 = vmax.f32 %v259, 0.0
    %v388 = vmax.f32 %v260, 0.0
    %v389 = vmax.f32 %v261, 0.0
    %v390 = vmax.f32 %v262, 0.0
    %v391 = vmax.f32 %v263, 0.0
    %v392 = vmax.f32 %v264, 0.0
    %v393 = vmax.f32 %v265, 0.0
    %v394 = vmax.f32 %v266, 0.0
    %v395 = vmax.f32 %v267, 0.0
    %v396 = vmax.f32 %v268, 0.0
    %v397 = vmax.f32 %v269, 0.0
    %v398 = vmax.f32 %v270, 0.0
    %v399 = vmax.f32 %v271, 0.0
    %v400 = vmax.f32 %v272, 0.0
    %v401 = vmax.f32 %v273, 0.0
    %v402 = vmax.f32 %v274, 0.0
    %v403 = vmax.f32 %v275, 0.0
    %v404 = vmax.f32 %v276, 0.0
    %v405 = vmax.f32 %v277, 0.0
    %v406 = vmax.f32 %v278, 0.0
    %v407 = vmax.f32 %v279, 0.0
    %v408 = vmax.f32 %v280, 0.0
    %v409 = vmin.f32 %v281, 6.0
    %v410 = vmin.f32 %v282, 6.0
    %v411 = vmin.f32 %v283, 6.0
    %v412 = vmin.f32 %v284, 6.0
    %v413 = vmin.f32 %v285, 6.0
    %v414 = vmin.f32 %v286, 6.0
    %v415 = vmin.f32 %v287, 6.0
    %v416 = vmin.f32 %v288, 6.0
    %v417 = vmin.f32 %v289, 6.0
    %v418 = vmin.f32 %v290, 6.0
    %v419 = vmin.f32 %v291, 6.0
    %v420 = vmin.f32 %v292, 6.0
    %v421 = vmin.f32 %v293, 6.0
    %v422 = vmin.f32 %v294, 6.0
    %v423 = vmin.f32 %v295, 6.0
    %v424 = vmin.f32 %v296, 6.0
    %v425 = vmin.f32 %v297, 6.0
    %v426 = vmin.f32 %v298, 6.0
    %v427 = vmin.f32 %v299, 6.0
    %v428 = vmin.f32 %v300, 6.0
    %v429 = vmin.f32 %v301, 6.0
    %v430 = vmin.f32 %v302, 6.0
    %v431 = vmin.f32 %v303, 6.0
    %v432 = vmin.f32 %v304, 6.0
    %v433 = vmin.f32 %v305, 6.0
    %v434 = vmin.f32 %v306, 6.0
    %v435 = vmin.f32 %v307, 6.0
    %v436 = vmin.f32 %v308, 6.0
    %v437 = vmin.f32 %v309, 6.0
    %v438 = vmin.f32 %v310, 6.0
    %v439 = vmin.f32 %v311, 6.0
    %v440 = vmin.f32 %v312, 6.0
    %v441 = vmin.f32 %v313, 6.0
    %v442 = vmin.f32 %v314, 6.0
    %v443 = vmin.f32 %v315, 6.0
    %v444 = vmin.f32 %v316, 6.0
    %v445 = vmin.f32 %v317, 6.0
    %v446 = vmin.f32 %v318, 6.0
    %v447 = vmin.f32 %v319, 6.0
    %v448 = vmin.f32 %v320, 6.0
    %v449 = vmin.f32 %v321, 6.0
    %v450 = vmin.f32 %v322, 6.0
    %v451 = vmin.f32 %v323, 6.0
    %v452 = vmin.f32 %v324, 6.0
    %v453 = vmin.f32 %v325, 6.0
    %v454 = vmin.f32 %v326, 6.0
    %v455 = vmin.f32 %v327, 6.0
    %v456 = vmin.f32 %v328, 6.0
    %v457 = vmin.f32 %v329, 6.0
    %v458 = vmin.f32 %v330, 6.0
    %v459 = vmin.f32 %v331, 6.0
    %v460 = vmin.f32 %v332, 6.0
    %v461 = vmin.f32 %v333, 6.0
    %v462 = vmin.f32 %v334, 6.0
    %v463 = vmin.f32 %v335, 6.0
    %v464 = vmin.f32 %v336, 6.0
    %v465 = vmin.f32 %v337, 6.0
    %v466 = vmin.f32 %v338, 6.0
    %v467 = vmin.f32 %v339, 6.0
    %v468 = vmin.f32 %v340, 6.0
    %v469 = vmin.f32 %v341, 6.0
    %v470 = vmin.f32 %v342, 6.0
    %v471 = vmin.f32 %v343, 6.0
    %v472 = vmin.f32 %v344, 6.0
    %v473 = vmin.f32 %v345, 6.0
    %v474 = vmin.f32 %v346, 6.0
    %v475 = vmin.f32 %v347, 6.0
    %v476 = vmin.f32 %v348, 6.0
    %v477 = vmin.f32 %v349, 6.0
    %v478 = vmin.f32 %v350, 6.0
    %v479 = vmin.f32 %v351, 6.0
    %v480 = vmin.f32 %v352, 6.0
    %v481 = vmin.f32 %v353, 6.0
    %v482 = vmin.f32 %v354, 6.0
    %v483 = vmin.f32 %v355, 6.0
    %v484 = vmin.f32 %v356, 6.0
    %v485 = vmin.f32 %v357, 6.0
    %v486 = vmin.f32 %v358, 6.0
    %v487 = vmin.f32 %v359, 6.0
    %v488 = vmin.f32 %v360, 6.0
    %v489 = vmin.f32 %v361, 6.0
    %v490 = vmin.f32 %v362, 6.0
    %v491 = vmin.f32 %v363, 6.0
    %v492 = vmin.f32 %v364, 6.0
    %v493 = vmin.f32 %v365, 6.0
    %v494 = vmin.f32 %v366, 6.0
    %v495 = vmin.f32 %v367, 6.0
    %v496 = vmin.f32 %v368, 6.0
    %v497 = vmin.f32 %v369, 6.0
    %v498 = vmin.f32 %v370, 6.0
    %v499 = vmin.f32 %v371, 6.0
    %v500 = vmin.f32 %v372, 6.0
    %v501 = vmin.f32 %v373, 6.0
    %v502 = vmin.f32 %v374, 6.0
    %v503 = vmin.f32 %v375, 6.0
    %v504 = vmin.f32 %v376, 6.0
    %v505 = vmin.f32 %v377, 6.0
    %v506 = vmin.f32 %v378, 6.0
    %v507 = vmin.f32 %v379, 6.0
    %v508 = vmin.f32 %v380, 6.0
    %v509 = vmin.f32 %v381, 6.0
    %v510 = vmin.f32 %v382, 6.0
    %v511 = vmin.f32 %v383, 6.0
    %v512 = vmin.f32 %v384, 6.0
    %v513 = vmin.f32 %v385, 6.0
    %v514 = vmin.f32 %v386, 6.0
    %v515 = vmin.f32 %v387, 6.0
    %v516 = vmin.f32 %v388, 6.0
    %v517 = vmin.f32 %v389, 6.0
    %v518 = vmin.f32 %v390, 6.0
    %v519 = vmin.f32 %v391, 6.0
    %v520 = vmin.f32 %v392, 6.0
    %v521 = vmin.f32 %v393, 6.0
    %v522 = vmin.f32 %v394, 6.0
    %v523 = vmin.f32 %v395, 6.0
    %v524 = vmin.f32 %v396, 6.0
    %v525 = vmin.f32 %v397, 6.0
    %v526 = vmin.f32 %v398, 6.0
    %v527 = vmin.f32 %v399, 6.0
    %v528 = vmin.f32 %v400, 6.0
    %v529 = vmin.f32 %v401, 6.0
    %v530 = vmin.f32 %v402, 6.0
    %v531 = vmin.f32 %v403, 6.0
    %v532 = vmin.f32 %v404, 6.0
    %v533 = vmin.f32 %v405, 6.0
    %v534 = vmin.f32 %v406, 6.0
    %v535 = vmin.f32 %v407, 6.0
    %v536 = vmin.f32 %v408, 6.0
    %v537 = vrcp.pop 6.0
    %v538 = vmul.f32 6.0, %v537
    %v539 = vsub.f32 1.0, %v538
    %v540 = vmul.f32 %v537, %v539
    %v541 = vadd.f32 %v537, %v540
    %vm542 = vweird.f32 %v537
    %v543 = vsel %vm542, %v537, %v541
    %v544 = vmul.f32 %v409, %v543
    %v545 = vmul.f32 %v410, %v543
    %v546 = vmul.f32 %v411, %v543
    %v547 = vmul.f32 %v412, %v543
    %v548 = vmul.f32 %v413, %v543
    %v549 = vmul.f32 %v414, %v543
    %v550 = vmul.f32 %v415, %v543
    %v551 = vmul.f32 %v416, %v543
    %v552 = vmul.f32 %v417, %v543
    %v553 = vmul.f32 %v418, %v543
    %v554 = vmul.f32 %v419, %v543
    %v555 = vmul.f32 %v420, %v543
    %v556 = vmul.f32 %v421, %v543
    %v557 = vmul.f32 %v422, %v543
    %v558 = vmul.f32 %v423, %v543
    %v559 = vmul.f32 %v424, %v543
    %v560 = vmul.f32 %v425, %v543
    %v561 = vmul.f32 %v426, %v543
    %v562 = vmul.f32 %v427, %v543
    %v563 = vmul.f32 %v428, %v543
    %v564 = vmul.f32 %v429, %v543
    %v565 = vmul.f32 %v430, %v543
    %v566 = vmul.f32 %v431, %v543
    %v567 = vmul.f32 %v432, %v543
    %v568 = vmul.f32 %v433, %v543
    %v569 = vmul.f32 %v434, %v543
    %v570 = vmul.f32 %v435, %v543
    %v571 = vmul.f32 %v436, %v543
    %v572 = vmul.f32 %v437, %v543
    %v573 = vmul.f32 %v438, %v543
    %v574 = vmul.f32 %v439, %v543
    %v575 = vmul.f32 %v440, %v543
    %v576 = vmul.f32 %v441, %v543
    %v577 = vmul.f32 %v442, %v543
    %v578 = vmul.f32 %v443, %v543
    %v579 = vmul.f32 %v444, %v543
    %v580 = vmul.f32 %v445, %v543
    %v581 = vmul.f32 %v446, %v543
    %v582 = vmul.f32 %v447, %v543
    %v583 = vmul.f32 %v448, %v543
    %v584 = vmul.f32 %v449, %v543
    %v585 = vmul.f32 %v450, %v543
    %v586 = vmul.f32 %v451, %v543
    %v587 = vmul.f32 %v452, %v543
    %v588 = vmul.f32 %v453, %v543
    %v589 = vmul.f32 %v454, %v543
    %v590 = vmul.f32 %v455, %v543
    %v591 = vmul.f32 %v456, %v543
    %v592 = vmul.f32 %v457, %v543
    %v593 = vmul.f32 %v458, %v543
    %v594 = vmul.f32 %v459, %v543
    %v595 = vmul.f32 %v460, %v543
    %v596 = vmul.f32 %v461, %v543
    %v597 = vmul.f32 %v462, %v543
    %v598 = vmul.f32 %v463, %v543
    %v599 = vmul.f32 %v464, %v543
    %v600 = vmul.f32 %v465, %v543
    %v601 = vmul.f32 %v466, %v543
    %v602 = vmul.f32 %v467, %v543
    %v603 = vmul.f32 %v468, %v543
    %v604 = vmul.f32 %v469, %v543
    %v605 = vmul.f32 %v470, %v543
    %v606 = vmul.f32 %v471, %v543
    %v607 = vmul.f32 %v472, %v543
    %v608 = vmul.f32 %v473, %v543
    %v609 = vmul.f32 %v474, %v543
    %v610 = vmul.f32 %v475, %v543
    %v611 = vmul.f32 %v476, %v543
    %v612 = vmul.f32 %v477, %v543
    %v613 = vmul.f32 %v478, %v543
    %v614 = vmul.f32 %v479, %v543
    %v615 = vmul.f32 %v480, %v543
    %v616 = vmul.f32 %v481, %v543
    %v617 = vmul.f32 %v482, %v543
    %v618 = vmul.f32 %v483, %v543
    %v619 = vmul.f32 %v484, %v543
    %v620 = vmul.f32 %v485, %v543
    %v621 = vmul.f32 %v486, %v543
    %v622 = vmul.f32 %v487, %v543
    %v623 = vmul.f32 %v488, %v543
    %v624 = vmul.f32 %v489, %v543
    %v625 = vmul.f32 %v490, %v543
    %v626 = vmul.f32 %v491, %v543
    %v627 = vmul.f32 %v492, %v543
    %v628 = vmul.f32 %v493, %v543
    %v629 = vmul.f32 %v494, %v543
    %v630 = vmul.f32 %v495, %v543
    %v631 = vmul.f32 %v496, %v543
    %v632 = vmul.f32 %v497, %v543
    %v633 = vmul.f32 %v498, %v543
    %v634 = vmul.f32 %v499, %v543
    %v635 = vmul.f32 %v500, %v543
    %v636 = vmul.f32 %v501, %v543
    %v637 = vmul.f32 %v502, %v543
    %v638 = vmul.f32 %v503, %v543
    %v639 = vmul.f32 %v504, %v543
    %v640 = vmul.f32 %v505, %v543
    %v641 = vmul.f32 %v506, %v543
    %v642 = vmul.f32 %v507, %v543
    %v643 = vmul.f32 %v508, %v543
    %v644 = vmul.f32 %v509, %v543
    %v645 = vmul.f32 %v510, %v543
    %v646 = vmul.f32 %v511, %v543
    %v647 = vmul.f32 %v512, %v543
    %v648 = vmul.f32 %v513, %v543
    %v649 = vmul.f32 %v514, %v543
    %v650 = vmul.f32 %v515, %v543
    %v651 = vmul.f32 %v516, %v543
    %v652 = vmul.f32 %v517, %v543
    %v653 = vmul.f32 %v518, %v543
    %v654 = vmul.f32 %v519, %v543
    %v655 = vmul.f32 %v520, %v543
    %v656 = vmul.f32 %v521, %v543
    %v657 = vmul.f32 %v522, %v543
    %v658 = vmul.f32 %v523, %v543
    %v659 = vmul.f32 %v524, %v543
    %v660 = vmul.f32 %v525, %v543
    %v661 = vmul.f32 %v526, %v543
    %v662 = vmul.f32 %v527, %v543
    %v663 = vmul.f32 %v528, %v543
    %v664 = vmul.f32 %v529, %v543
    %v665 = vmul.f32 %v530, %v543
    %v666 = vmul.f32 %v531, %v543
    %v667 = vmul.f32 %v532, %v543
    %v668 = vmul.f32 %v533, %v543
    %v669 = vmul.f32 %v534, %v543
    %v670 = vmul.f32 %v535, %v543
    %v671 = vmul.f32 %v536, %v543
    %672 = vst [vmem:[#allocation5] sm:$0xff] %v544
    %673 = vst [vmem:[#allocation5 + $0x8] sm:$0xff] %v545
    %674 = vst [vmem:[#allocation5 + $0x10] sm:$0xff] %v546
    %675 = vst [vmem:[#allocation5 + $0x18] sm:$0xff] %v547
    %676 = vst [vmem:[#allocation5 + $0x20] sm:$0xff] %v548
    %677 = vst [vmem:[#allocation5 + $0x28] sm:$0xff] %v549
    %678 = vst [vmem:[#allocation5 + $0x30] sm:$0xff] %v550
    %679 = vst [vmem:[#allocation5 + $0x38] sm:$0xff] %v551
    %680 = vst [vmem:[#allocation5 + $0x40] sm:$0xff] %v552
    %681 = vst [vmem:[#allocation5 + $0x48] sm:$0xff] %v553
    %682 = vst [vmem:[#allocation5 + $0x50] sm:$0xff] %v554
    %683 = vst [vmem:[#allocation5 + $0x58] sm:$0xff] %v555
    %684 = vst [vmem:[#allocation5 + $0x60] sm:$0xff] %v556
    %685 = vst [vmem:[#allocation5 + $0x68] sm:$0xff] %v557
    %686 = vst [vmem:[#allocation5 + $0x70] sm:$0xff] %v558
    %687 = vst [vmem:[#allocation5 + $0x78] sm:$0xff] %v559
    %688 = vst [vmem:[#allocation5 + $0x80] sm:$0xff] %v560
    %689 = vst [vmem:[#allocation5 + $0x88] sm:$0xff] %v561
    %690 = vst [vmem:[#allocation5 + $0x90] sm:$0xff] %v562
    %691 = vst [vmem:[#allocation5 + $0x98] sm:$0xff] %v563
    %692 = vst [vmem:[#allocation5 + $0xa0] sm:$0xff] %v564
    %693 = vst [vmem:[#allocation5 + $0xa8] sm:$0xff] %v565
    %694 = vst [vmem:[#allocation5 + $0xb0] sm:$0xff] %v566
    %695 = vst [vmem:[#allocation5 + $0xb8] sm:$0xff] %v567
    %696 = vst [vmem:[#allocation5 + $0xc0] sm:$0xff] %v568
    %697 = vst [vmem:[#allocation5 + $0xc8] sm:$0xff] %v569
    %698 = vst [vmem:[#allocation5 + $0xd0] sm:$0xff] %v570
    %699 = vst [vmem:[#allocation5 + $0xd8] sm:$0xff] %v571
    %700 = vst [vmem:[#allocation5 + $0xe0] sm:$0xff] %v572
    %701 = vst [vmem:[#allocation5 + $0xe8] sm:$0xff] %v573
    %702 = vst [vmem:[#allocation5 + $0xf0] sm:$0xff] %v574
    %703 = vst [vmem:[#allocation5 + $0xf8] sm:$0xff] %v575
    %704 = vst [vmem:[#allocation5 + $0x100] sm:$0xff] %v576
    %705 = vst [vmem:[#allocation5 + $0x108] sm:$0xff] %v577
    %706 = vst [vmem:[#allocation5 + $0x110] sm:$0xff] %v578
    %707 = vst [vmem:[#allocation5 + $0x118] sm:$0xff] %v579
    %708 = vst [vmem:[#allocation5 + $0x120] sm:$0xff] %v580
    %709 = vst [vmem:[#allocation5 + $0x128] sm:$0xff] %v581
    %710 = vst [vmem:[#allocation5 + $0x130] sm:$0xff] %v582
    %711 = vst [vmem:[#allocation5 + $0x138] sm:$0xff] %v583
    %712 = vst [vmem:[#allocation5 + $0x140] sm:$0xff] %v584
    %713 = vst [vmem:[#allocation5 + $0x148] sm:$0xff] %v585
    %714 = vst [vmem:[#allocation5 + $0x150] sm:$0xff] %v586
    %715 = vst [vmem:[#allocation5 + $0x158] sm:$0xff] %v587
    %716 = vst [vmem:[#allocation5 + $0x160] sm:$0xff] %v588
    %717 = vst [vmem:[#allocation5 + $0x168] sm:$0xff] %v589
    %718 = vst [vmem:[#allocation5 + $0x170] sm:$0xff] %v590
    %719 = vst [vmem:[#allocation5 + $0x178] sm:$0xff] %v591
    %720 = vst [vmem:[#allocation5 + $0x180] sm:$0xff] %v592
    %721 = vst [vmem:[#allocation5 + $0x188] sm:$0xff] %v593
    %722 = vst [vmem:[#allocation5 + $0x190] sm:$0xff] %v594
    %723 = vst [vmem:[#allocation5 + $0x198] sm:$0xff] %v595
    %724 = vst [vmem:[#allocation5 + $0x1a0] sm:$0xff] %v596
    %725 = vst [vmem:[#allocation5 + $0x1a8] sm:$0xff] %v597
    %726 = vst [vmem:[#allocation5 + $0x1b0] sm:$0xff] %v598
    %727 = vst [vmem:[#allocation5 + $0x1b8] sm:$0xff] %v599
    %728 = vst [vmem:[#allocation5 + $0x1c0] sm:$0xff] %v600
    %729 = vst [vmem:[#allocation5 + $0x1c8] sm:$0xff] %v601
    %730 = vst [vmem:[#allocation5 + $0x1d0] sm:$0xff] %v602
    %731 = vst [vmem:[#allocation5 + $0x1d8] sm:$0xff] %v603
    %732 = vst [vmem:[#allocation5 + $0x1e0] sm:$0xff] %v604
    %733 = vst [vmem:[#allocation5 + $0x1e8] sm:$0xff] %v605
    %734 = vst [vmem:[#allocation5 + $0x1f0] sm:$0xff] %v606
    %735 = vst [vmem:[#allocation5 + $0x1f8] sm:$0xff] %v607
    %736 = vst [vmem:[#allocation5 + $0x200] sm:$0xff] %v608
    %737 = vst [vmem:[#allocation5 + $0x208] sm:$0xff] %v609
    %738 = vst [vmem:[#allocation5 + $0x210] sm:$0xff] %v610
    %739 = vst [vmem:[#allocation5 + $0x218] sm:$0xff] %v611
    %740 = vst [vmem:[#allocation5 + $0x220] sm:$0xff] %v612
    %741 = vst [vmem:[#allocation5 + $0x228] sm:$0xff] %v613
    %742 = vst [vmem:[#allocation5 + $0x230] sm:$0xff] %v614
    %743 = vst [vmem:[#allocation5 + $0x238] sm:$0xff] %v615
    %744 = vst [vmem:[#allocation5 + $0x240] sm:$0xff] %v616
    %745 = vst [vmem:[#allocation5 + $0x248] sm:$0xff] %v617
    %746 = vst [vmem:[#allocation5 + $0x250] sm:$0xff] %v618
    %747 = vst [vmem:[#allocation5 + $0x258] sm:$0xff] %v619
    %748 = vst [vmem:[#allocation5 + $0x260] sm:$0xff] %v620
    %749 = vst [vmem:[#allocation5 + $0x268] sm:$0xff] %v621
    %750 = vst [vmem:[#allocation5 + $0x270] sm:$0xff] %v622
    %751 = vst [vmem:[#allocation5 + $0x278] sm:$0xff] %v623
    %752 = vst [vmem:[#allocation5 + $0x280] sm:$0xff] %v624
    %753 = vst [vmem:[#allocation5 + $0x288] sm:$0xff] %v625
    %754 = vst [vmem:[#allocation5 + $0x290] sm:$0xff] %v626
    %755 = vst [vmem:[#allocation5 + $0x298] sm:$0xff] %v627
    %756 = vst [vmem:[#allocation5 + $0x2a0] sm:$0xff] %v628
    %757 = vst [vmem:[#allocation5 + $0x2a8] sm:$0xff] %v629
    %758 = vst [vmem:[#allocation5 + $0x2b0] sm:$0xff] %v630
    %759 = vst [vmem:[#allocation5 + $0x2b8] sm:$0xff] %v631
    %760 = vst [vmem:[#allocation5 + $0x2c0] sm:$0xff] %v632
    %761 = vst [vmem:[#allocation5 + $0x2c8] sm:$0xff] %v633
    %762 = vst [vmem:[#allocation5 + $0x2d0] sm:$0xff] %v634
    %763 = vst [vmem:[#allocation5 + $0x2d8] sm:$0xff] %v635
    %764 = vst [vmem:[#allocation5 + $0x2e0] sm:$0xff] %v636
    %765 = vst [vmem:[#allocation5 + $0x2e8] sm:$0xff] %v637
    %766 = vst [vmem:[#allocation5 + $0x2f0] sm:$0xff] %v638
    %767 = vst [vmem:[#allocation5 + $0x2f8] sm:$0xff] %v639
    %768 = vst [vmem:[#allocation5 + $0x300] sm:$0xff] %v640
    %769 = vst [vmem:[#allocation5 + $0x308] sm:$0xff] %v641
    %770 = vst [vmem:[#allocation5 + $0x310] sm:$0xff] %v642
    %771 = vst [vmem:[#allocation5 + $0x318] sm:$0xff] %v643
    %772 = vst [vmem:[#allocation5 + $0x320] sm:$0xff] %v644
    %773 = vst [vmem:[#allocation5 + $0x328] sm:$0xff] %v645
    %774 = vst [vmem:[#allocation5 + $0x330] sm:$0xff] %v646
    %775 = vst [vmem:[#allocation5 + $0x338] sm:$0xff] %v647
    %776 = vst [vmem:[#allocation5 + $0x340] sm:$0xff] %v648
    %777 = vst [vmem:[#allocation5 + $0x348] sm:$0xff] %v649
    %778 = vst [vmem:[#allocation5 + $0x350] sm:$0xff] %v650
    %779 = vst [vmem:[#allocation5 + $0x358] sm:$0xff] %v651
    %780 = vst [vmem:[#allocation5 + $0x360] sm:$0xff] %v652
    %781 = vst [vmem:[#allocation5 + $0x368] sm:$0xff] %v653
    %782 = vst [vmem:[#allocation5 + $0x370] sm:$0xff] %v654
    %783 = vst [vmem:[#allocation5 + $0x378] sm:$0xff] %v655
    %784 = vst [vmem:[#allocation5 + $0x380] sm:$0xff] %v656
    %785 = vst [vmem:[#allocation5 + $0x388] sm:$0xff] %v657
    %786 = vst [vmem:[#allocation5 + $0x390] sm:$0xff] %v658
    %787 = vst [vmem:[#allocation5 + $0x398] sm:$0xff] %v659
    %788 = vst [vmem:[#allocation5 + $0x3a0] sm:$0xff] %v660
    %789 = vst [vmem:[#allocation5 + $0x3a8] sm:$0xff] %v661
    %790 = vst [vmem:[#allocation5 + $0x3b0] sm:$0xff] %v662
    %791 = vst [vmem:[#allocation5 + $0x3b8] sm:$0xff] %v663
    %792 = vst [vmem:[#allocation5 + $0x3c0] sm:$0xff] %v664
    %793 = vst [vmem:[#allocation5 + $0x3c8] sm:$0xff] %v665
    %794 = vst [vmem:[#allocation5 + $0x3d0] sm:$0xff] %v666
    %795 = vst [vmem:[#allocation5 + $0x3d8] sm:$0xff] %v667
    %796 = vst [vmem:[#allocation5 + $0x3e0] sm:$0xff] %v668
    %797 = vst [vmem:[#allocation5 + $0x3e8] sm:$0xff] %v669
    %798 = vst [vmem:[#allocation5 + $0x3f0] sm:$0xff] %v670
    %799 = vst [vmem:[#allocation5 + $0x3f8] sm:$0xff] %v671
    // Predicated region
    $region10: #{tpu_custom_call.1} parent=1 // pred_check
      _
    $region11: #{tpu_custom_call.1} parent=1 // pred_check_branch
      %801 = sbr.rel (0) target = $region13
    $region12: #{tpu_custom_call.1} parent=1 // pred_region
      %803 = vsyncadd [#allocation4], 0
      %s804 = sshll.u32 [#allocation5], 4
      %s805 = int_to_ptr.vmem [resolvable:$true] %s804
      %s806 = sshll.u32 %s1, 4
      %s807 = int_to_ptr.hbm [resolvable:$true] %s806
      %812 = dma.vmem_to_hbm [thread:$0]  %s805, 16384, %s807, [#allocation4], 2048, 2048, 128
    $region13: #{tpu_custom_call.1} parent=1 // pred_fallthru
      _
    // Predicated region
    $region14: #{tpu_custom_call.1} parent=1 // pred_check
      _
    $region15: #{tpu_custom_call.1} parent=1 // pred_check_branch
      %814 = sbr.rel (0) target = $region17
    $region16: #{tpu_custom_call.1} parent=1 // pred_region
      %816 = dma.done [#allocation4], 16384
    $region17: #{tpu_custom_call.1} parent=1 // pred_fallthru
      _
    %817 = vsyncpa [#allocation3], 1
    %818 = vsyncpa [#allocation4], 1

</llo_original>
